<compile_context>
chip_gen: v7x
topology: tpu7x:2x2x1
jax: 0.10.0
libtpu: 0.0.40
codegen_flags: <defaults>
</compile_context>

<pallas_src>
import numpy as np
import jax
import jax.numpy as jnp
from jax import lax
from jax.experimental import pallas as pl
from jax.experimental.pallas import tpu as pltpu


# ----------------------------------------------------------------------------
# Host-side glue: 3D sin/cos positional embedding (same math as diffusers'
# get_3d_sincos_pos_embed used by the PyTorch module).
# ----------------------------------------------------------------------------
def _get_1d_sincos_pos_embed_from_grid(embed_dim, pos):
    omega = np.arange(embed_dim // 2, dtype=np.float64)
    omega /= embed_dim / 2.0
    omega = 1.0 / 10000 ** omega
    pos = pos.reshape(-1)
    out = np.einsum("m,d->md", pos, omega)
    return np.concatenate([np.sin(out), np.cos(out)], axis=1)


def _get_2d_sincos_pos_embed_from_grid(embed_dim, grid):
    emb_h = _get_1d_sincos_pos_embed_from_grid(embed_dim // 2, grid[0])
    emb_w = _get_1d_sincos_pos_embed_from_grid(embed_dim // 2, grid[1])
    return np.concatenate([emb_h, emb_w], axis=1)


def get_3d_sincos_pos_embed(embed_dim, spatial_size, temporal_size,
                            spatial_interpolation_scale=1.0,
                            temporal_interpolation_scale=1.0):
    if embed_dim % 4 != 0:
        raise ValueError("`embed_dim` must be divisible by 4")
    if isinstance(spatial_size, int):
        spatial_size = (spatial_size, spatial_size)
    embed_dim_spatial = 3 * embed_dim // 4
    embed_dim_temporal = embed_dim // 4

    grid_h = np.arange(spatial_size[1], dtype=np.float32) / spatial_interpolation_scale
    grid_w = np.arange(spatial_size[0], dtype=np.float32) / spatial_interpolation_scale
    grid = np.meshgrid(grid_w, grid_h)
    grid = np.stack(grid, axis=0)
    grid = grid.reshape([2, 1, spatial_size[1], spatial_size[0]])
    pos_embed_spatial = _get_2d_sincos_pos_embed_from_grid(embed_dim_spatial, grid)

    grid_t = np.arange(temporal_size, dtype=np.float32) / temporal_interpolation_scale
    pos_embed_temporal = _get_1d_sincos_pos_embed_from_grid(embed_dim_temporal, grid_t)

    pos_embed_spatial = np.repeat(pos_embed_spatial[np.newaxis], temporal_size, axis=0)
    pos_embed_temporal = np.repeat(pos_embed_temporal[:, np.newaxis],
                                   spatial_size[0] * spatial_size[1], axis=1)
    return np.concatenate([pos_embed_temporal, pos_embed_spatial], axis=-1)  # [T, H*W, D]


# ----------------------------------------------------------------------------
# Pallas kernels.  One grid step = one group of TF frames:
#   ids_ref : (M, 1)     int32, block-local flat row index into pos_ref
#   pos_ref : (THW, D)   f32   pos-table rows of the TF frames of this group
#   mask_ref: (M, D)            mask tokens (t-major, contiguous)
#   out_ref : (M, D)
# with M = TF*B*n_drop, THW = TF*H*W.  The gather is a one-hot matmul on the
# MXU; an out-of-range id simply produces a zero pos row (valid inputs unaffected).
# ----------------------------------------------------------------------------
def _gather_onehot(ids_ref, pos_ref):
    M = ids_ref.shape[0]
    THW = pos_ref.shape[0]
    ids = ids_ref[...]                                           # (M, 1) int32
    cols = lax.broadcasted_iota(jnp.int32, (M, THW), 1)          # lane iota
    onehot = (ids == cols).astype(jnp.float32)                   # (M, THW)
    return jnp.dot(onehot, pos_ref[...].astype(jnp.float32),
                   preferred_element_type=jnp.float32)           # (M, D)


def _kernel_add(ids_ref, pos_ref, mask_ref, w_ref, b_ref, out_ref):
    """out = mask + gather(pos) @ W^T + b."""
    gathered = _gather_onehot(ids_ref, pos_ref)
    proj = jnp.dot(gathered, w_ref[...], preferred_element_type=jnp.float32)
    proj = proj + b_ref[...]                                     # (M, D) + (1, D)
    out_ref[...] = (mask_ref[...].astype(jnp.float32) + proj).astype(out_ref.dtype)


def _kernel_cat(ids_ref, pos_ref, mask_ref, w1_ref, w2_ref, out_ref):
    """out = [mask | gather(pos)] @ Wcat^T, split into two matmuls."""
    gathered = _gather_onehot(ids_ref, pos_ref)
    proj = jnp.dot(mask_ref[...].astype(jnp.float32), w1_ref[...],
                   preferred_element_type=jnp.float32)
    proj = proj + jnp.dot(gathered, w2_ref[...],
                          preferred_element_type=jnp.float32)
    out_ref[...] = proj.astype(out_ref.dtype)


# ----------------------------------------------------------------------------
# Wrappers
# ----------------------------------------------------------------------------
def _choose_frames_per_step(T, Bn, HW, target_m=256):
    """Frames per grid step: raise matmul M toward `target_m` while keeping
    >= 2 grid steps (v7x megacore) and (8,128)-legal block shapes."""
    def legal(d):
        if T % d != 0:
            return False
        if T // d == 1:          # single step -> blocks equal full dims, always legal
            return True
        return (d * Bn) % 8 == 0 and (d * HW) % 8 == 0
    cands = [d for d in range(1, T + 1) if legal(d)]
    multi = [d for d in cands if T // d >= 2]
    pool = multi if multi else cands
    for d in pool:
        if d * Bn >= target_m:
            return d
    return pool[-1]


def _vmem_limit_bytes(THW, M, D, n_weight_mats):
    f32 = 4
    need = (2 * THW * D * f32                    # pos block (double-buffered)
            + 2 * 2 * M * D * f32                # mask + out blocks (double-buffered)
            + 2 * M * 128 * f32                  # ids block, lane-padded (double-buffered)
            + 2 * n_weight_mats * D * D * f32    # weights (double-buffered)
            + 2 * D * f32                        # bias
            + M * max(THW, 128) * f32            # one-hot intermediate
            + 2 * M * D * f32)                   # gathered / proj intermediates
    limit = max(int(need * 1.5) + (1 << 20), 32 << 20)
    # v7x has only 64 MiB physical VMEM; cap the request well below it.
    # TODO(synk): add a tiling axis over B if `need` ever exceeds this cap.
    return min(limit, 56 << 20)


def _prep_inputs(ids_drop, mask_token, B, T, n_drop, D, HW, TF):
    """b-major rows (r = b*T + t) -> t-major flat 2D blocks (done in XLA)."""
    Bn = B * n_drop
    ids_t = jnp.transpose(ids_drop.reshape(B, T, n_drop).astype(jnp.int32),
                          (1, 0, 2))                              # (T, B, n_drop)
    # block-local flat row offset into the (TF*HW, D) pos block of group t // TF
    local = (jnp.arange(T, dtype=jnp.int32) % TF)[:, None, None] * HW
    ids_col = (ids_t + local).reshape(T * Bn, 1)                  # (T*Bn, 1)
    mask2d = jnp.transpose(mask_token.reshape(B, T, n_drop, D),
                           (1, 0, 2, 3)).reshape(T * Bn, D)       # (T*Bn, D)
    return ids_col, mask2d


def _unflatten_out(out2d, B, T, n_drop, D):
    out = out2d.reshape(T, B, n_drop, D)
    return jnp.transpose(out, (1, 0, 2, 3)).reshape(B * T, n_drop, D)


def _build_specs(G, TF, Bn, HW, D, weight_specs):
    M = TF * Bn
    THW = TF * HW
    in_specs = [
        pl.BlockSpec((M, 1), lambda g: (g, 0)),        # ids (block-local flat rows)
        pl.BlockSpec((THW, D), lambda g: (g, 0)),      # pos rows of this frame group
        pl.BlockSpec((M, D), lambda g: (g, 0)),        # mask rows (contiguous)
    ] + weight_specs
    out_specs = pl.BlockSpec((M, D), lambda g: (g, 0))
    return pltpu.PrefetchScalarGridSpec(
        num_scalar_prefetch=0, grid=(G,),
        in_specs=in_specs, out_specs=out_specs)


def mask_patch_embed_add(ids_drop, mask_token, pos_table, weight_t, bias, *, batch_size):
    BT, n_drop = ids_drop.shape
    T, HW, D = pos_table.shape
    B = batch_size
    assert BT == B * T
    Bn = B * n_drop
    TF = _choose_frames_per_step(T, Bn, HW)
    G, M, THW = T // TF, TF * Bn, TF * HW

    ids_col, mask2d = _prep_inputs(ids_drop, mask_token, B, T, n_drop, D, HW, TF)
    pos2d = pos_table.reshape(T * HW, D).astype(jnp.float32)

    grid_spec = _build_specs(
        G, TF, Bn, HW, D,
        weight_specs=[pl.BlockSpec((D, D), lambda g: (0, 0)),     # W^T (constant)
                      pl.BlockSpec((1, D), lambda g: (0, 0))])    # bias (constant)
    out2d = pl.pallas_call(
        _kernel_add,
        out_shape=jax.ShapeDtypeStruct((T * Bn, D), mask_token.dtype),
        grid_spec=grid_spec,
        compiler_params=pltpu.CompilerParams(
            dimension_semantics=("parallel",),
            vmem_limit_bytes=_vmem_limit_bytes(THW, M, D, 1),
        ),
    )(ids_col, pos2d, mask2d, weight_t, bias)
    return _unflatten_out(out2d, B, T, n_drop, D)


def mask_patch_embed_cat(ids_drop, mask_token, pos_table, w1_t, w2_t, *, batch_size):
    BT, n_drop = ids_drop.shape
    T, HW, D = pos_table.shape
    B = batch_size
    assert BT == B * T
    Bn = B * n_drop
    TF = _choose_frames_per_step(T, Bn, HW)
    G, M, THW = T // TF, TF * Bn, TF * HW

    ids_col, mask2d = _prep_inputs(ids_drop, mask_token, B, T, n_drop, D, HW, TF)
    pos2d = pos_table.reshape(T * HW, D).astype(jnp.float32)

    grid_spec = _build_specs(
        G, TF, Bn, HW, D,
        weight_specs=[pl.BlockSpec((D, D), lambda g: (0, 0)),     # Wcat^T[:D]  (mask part)
                      pl.BlockSpec((D, D), lambda g: (0, 0))])    # Wcat^T[D:]  (pos part)
    out2d = pl.pallas_call(
        _kernel_cat,
        out_shape=jax.ShapeDtypeStruct((T * Bn, D), mask_token.dtype),
        grid_spec=grid_spec,
        compiler_params=pltpu.CompilerParams(
            dimension_semantics=("parallel",),
            vmem_limit_bytes=_vmem_limit_bytes(THW, M, D, 2),
        ),
    )(ids_col, pos2d, mask2d, w1_t, w2_t)
    return _unflatten_out(out2d, B, T, n_drop, D)


# ----------------------------------------------------------------------------
# Pure-JAX references (mirror the PyTorch forward)
# ----------------------------------------------------------------------------
def _ref_add(ids_drop, mask_token, pos_table, weight_t, bias, B):
    pos_rep = jnp.tile(pos_table, (B, 1, 1))                       # flatten(0,1) of repeat
    gathered = jnp.take_along_axis(pos_rep, ids_drop[:, :, None], axis=1)
    return mask_token + (gathered @ weight_t + bias)


def _ref_cat(ids_drop, mask_token, pos_table, wcat_t, B):
    pos_rep = jnp.tile(pos_table, (B, 1, 1))
    gathered = jnp.take_along_axis(pos_rep, ids_drop[:, :, None], axis=1)
    return jnp.concatenate([mask_token, gathered], axis=-1) @ wcat_t


# ----------------------------------------------------------------------------
if __name__ == "__main__":
    B, T, H, W = 2, 3, 4, 4            # ori_shape
    D = 128                            # embed_dim (divisible by 4, lane-dense output)
    N_DROP = 8
    HW = H * W
    BT = B * T

    # positional table [T, H*W, D] (spatial_size=(width, height) as in the module)
    pos_np = get_3d_sincos_pos_embed(D, (W, H), T, 1.0, 1.0)
    pos_table = jnp.asarray(pos_np, dtype=jnp.float32)

    key = jax.random.PRNGKey(0)
    k1, k2, k3, k4, k5 = jax.random.split(key, 5)
    ids_drop = jax.random.randint(k1, (BT, N_DROP), 0, HW, dtype=jnp.int32)
    mask_token = jax.random.normal(k2, (BT, N_DROP, D), dtype=jnp.float32)

    # ---- merge_type='add': nn.Linear(D, D, bias=True) --------------------
    bound = 1.0 / np.sqrt(D)
    weight_add = jax.random.uniform(k3, (D, D), minval=-bound, maxval=bound,
                                    dtype=jnp.float32)             # [out, in]
    bias_add = jax.random.uniform(k4, (1, D), minval=-bound, maxval=bound,
                                  dtype=jnp.float32)
    weight_add_t = weight_add.T                                     # [in, out]

    out_add = mask_patch_embed_add(ids_drop, mask_token, pos_table,
                                   weight_add_t, bias_add, batch_size=B)
    out_add = jax.block_until_ready(out_add)
    ref_add = _ref_add(ids_drop, mask_token, pos_table, weight_add_t, bias_add, B)
    np.testing.assert_allclose(np.asarray(out_add), np.asarray(ref_add),
                               rtol=1e-4, atol=1e-4)

    # ---- merge_type='cat': nn.Linear(2D, D, bias=False) ------------------
    bound_c = 1.0 / np.sqrt(2 * D)
    weight_cat = jax.random.uniform(k5, (D, 2 * D), minval=-bound_c, maxval=bound_c,
                                    dtype=jnp.float32)              # [out, 2*in]
    wcat_t = weight_cat.T                                           # [2D, D]
    w1_t, w2_t = wcat_t[:D, :], wcat_t[D:, :]                       # mask part / pos part

    out_cat = mask_patch_embed_cat(ids_drop, mask_token, pos_table,
                                   w1_t, w2_t, batch_size=B)
    out_cat = jax.block_until_ready(out_cat)
    ref_cat = _ref_cat(ids_drop, mask_token, pos_table, wcat_t, B)
    np.testing.assert_allclose(np.asarray(out_cat), np.asarray(ref_cat),
                               rtol=1e-4, atol=1e-4)

    print("KERNEL_OK")
</pallas_src>

<mosaic_0001>
module attributes {stable_mosaic.version = 11 : i64} {
  func.func @_kernel_add(%arg0: i32, %arg1: memref<16x1xi32, #tpu.memory_space<vmem>>, %arg2: memref<16x128xf32, #tpu.memory_space<vmem>>, %arg3: memref<16x128xf32, #tpu.memory_space<vmem>>, %arg4: memref<128x128xf32, #tpu.memory_space<vmem>>, %arg5: memref<1x128xf32, #tpu.memory_space<vmem>>, %arg6: memref<16x128xf32, #tpu.memory_space<vmem>>) attributes {dimension_semantics = [#tpu.dimension_semantics<parallel>], iteration_bounds = array<i64: 3>, scalar_prefetch = 0 : i64, scratch_operands = 0 : i64, tpu.core_type = #tpu.core_type<tc>, window_params = [{transform_indices = @transform_0, window_bounds = array<i64: 16, 1>}, {transform_indices = @transform_1, window_bounds = array<i64: 16, 128>}, {transform_indices = @transform_2, window_bounds = array<i64: 16, 128>}, {pipeline_mode = #tpu.pipeline_mode<synchronous>, transform_indices = @transform_3, window_bounds = array<i64: 128, 128>}, {pipeline_mode = #tpu.pipeline_mode<synchronous>, transform_indices = @transform_4, window_bounds = array<i64: 1, 128>}, {transform_indices = @transform_5, window_bounds = array<i64: 16, 128>}]} {
    %c0 = arith.constant 0 : index
    %c0_0 = arith.constant 0 : index
    %0 = vector.load %arg1[%c0, %c0_0] : memref<16x1xi32, #tpu.memory_space<vmem>>, vector<16x1xi32>
    %1 = tpu.iota {dimensions = array<i32: 1>} : vector<16x16xi32>
    %2 = vector.broadcast %0 : vector<16x1xi32> to vector<16x16xi32>
    %3 = arith.cmpi eq, %2, %1 : vector<16x16xi32>
    %4 = arith.extui %3 : vector<16x16xi1> to vector<16x16xi32>
    %5 = arith.sitofp %4 : vector<16x16xi32> to vector<16x16xf32>
    %c0_1 = arith.constant 0 : index
    %c0_2 = arith.constant 0 : index
    %6 = vector.load %arg2[%c0_1, %c0_2] : memref<16x128xf32, #tpu.memory_space<vmem>>, vector<16x128xf32>
    %cst = arith.constant dense<0.000000e+00> : vector<16x128xf32>
    %7 = tpu.matmul %5, %6, %cst {dimension_numbers = #tpu.dot_dimension_numbers<[1], [0], [0], [1], [0, 0, 1, 1], [], []>} : vector<16x16xf32>, vector<16x128xf32>, vector<16x128xf32> -> vector<16x128xf32>
    %c0_3 = arith.constant 0 : index
    %c0_4 = arith.constant 0 : index
    %8 = vector.load %arg4[%c0_3, %c0_4] : memref<128x128xf32, #tpu.memory_space<vmem>>, vector<128x128xf32>
    %cst_5 = arith.constant dense<0.000000e+00> : vector<16x128xf32>
    %9 = tpu.matmul %7, %8, %cst_5 {dimension_numbers = #tpu.dot_dimension_numbers<[1], [0], [0], [1], [0, 0, 1, 1], [], []>} : vector<16x128xf32>, vector<128x128xf32>, vector<16x128xf32> -> vector<16x128xf32>
    %c0_6 = arith.constant 0 : index
    %c0_7 = arith.constant 0 : index
    %10 = vector.load %arg5[%c0_6, %c0_7] : memref<1x128xf32, #tpu.memory_space<vmem>>, vector<1x128xf32>
    %11 = vector.broadcast %10 : vector<1x128xf32> to vector<16x128xf32>
    %12 = arith.addf %9, %11 : vector<16x128xf32>
    %c0_8 = arith.constant 0 : index
    %c0_9 = arith.constant 0 : index
    %13 = vector.load %arg3[%c0_8, %c0_9] : memref<16x128xf32, #tpu.memory_space<vmem>>, vector<16x128xf32>
    %14 = arith.addf %13, %12 : vector<16x128xf32>
    %c0_10 = arith.constant 0 : index
    %c0_11 = arith.constant 0 : index
    %15 = vector.load %arg6[%c0_10, %c0_11] : memref<16x128xf32, #tpu.memory_space<vmem>>, vector<16x128xf32>
    tpu.vector_store %arg6[%c0_10, %c0_11], %14 {strides = array<i32>} : memref<16x128xf32, #tpu.memory_space<vmem>>, vector<16x128xf32>,
    return
  }
  func.func @transform_0(%arg0: i32) -> (i32, i32) {
    %c0_i32 = arith.constant 0 : i32
    %c0_i32_0 = arith.constant 0 : i32
    return %arg0, %c0_i32 : i32, i32
  }
  func.func @transform_1(%arg0: i32) -> (i32, i32) {
    %c0_i32 = arith.constant 0 : i32
    %c0_i32_0 = arith.constant 0 : i32
    return %arg0, %c0_i32 : i32, i32
  }
  func.func @transform_2(%arg0: i32) -> (i32, i32) {
    %c0_i32 = arith.constant 0 : i32
    %c0_i32_0 = arith.constant 0 : i32
    return %arg0, %c0_i32 : i32, i32
  }
  func.func @transform_3(%arg0: i32) -> (i32, i32) {
    %c0_i32 = arith.constant 0 : i32
    %c0_i32_0 = arith.constant 0 : i32
    %c0_i32_1 = arith.constant 0 : i32
    return %c0_i32, %c0_i32_0 : i32, i32
  }
  func.func @transform_4(%arg0: i32) -> (i32, i32) {
    %c0_i32 = arith.constant 0 : i32
    %c0_i32_0 = arith.constant 0 : i32
    %c0_i32_1 = arith.constant 0 : i32
    return %c0_i32, %c0_i32_0 : i32, i32
  }
  func.func @transform_5(%arg0: i32) -> (i32, i32) {
    %c0_i32 = arith.constant 0 : i32
    %c0_i32_0 = arith.constant 0 : i32
    return %arg0, %c0_i32 : i32, i32
  }
}

</mosaic_0001>

<llo_original>
// kernel: tpu_custom_call.1
$region0: #{tpu_custom_call.1}
  #allocation0 [shape = 'u32[]', space=smem, size = 0x4, offset = 0x4, fixed_abs, tag = 'smem constant byte address 0x4 - core index']
  #allocation1 [shape = 'u32[144,128]{1,0:T(1,128)}', space=vmem, size = 0x12000, scoped, tag = 'internal scratch']
  %s0 = inlined_call_operand.vmem [shape: s32[48,1], index: 0, kind: input, shape index: {}]
  %s1 = inlined_call_operand.vmem [shape: f32[48,128], index: 1, kind: input, shape index: {}]
  %s2 = inlined_call_operand.hbm [shape: f32[48,128], index: 2, kind: input, shape index: {}]
  %s3 = inlined_call_operand.hbm [shape: f32[128,128], index: 3, kind: input, shape index: {}]
  %s4 = inlined_call_operand.vmem [shape: f32[1,128], index: 4, kind: input, shape index: {}]
  %s5 = inlined_call_operand.hbm [shape: f32[48,128], index: 5, kind: output, shape index: {}]
  %s6 = sld [smem:[#allocation0]]
  $region61: #{tpu_custom_call.1} parent=0
    _
  %s8 = ssub.s32 1, %s6
  %s9 = scalar_select 0, %s8, %s6
  $region1: #{tpu_custom_call.1} parent=0
    #allocation2 [shape = 'u8[16384]{0}', space=vmem, size = 0x4000, scoped, tag = 'input window, operand 2']
    #allocation3 [shape = 's32[2]{0}', space=sflag, size = 0x8, scoped, tag = 'scoped memory for tpu_custom_call.1']
    #allocation4 [shape = 's32[2]{0}', space=sflag, size = 0x8, scoped, tag = 'scoped memory for tpu_custom_call.1']
    #allocation5 [shape = 'u8[65536]{0}', space=vmem, size = 0x10000, scoped, tag = 'input window, operand 3, single buffered']
    #allocation6 [shape = 's32[1]{0}', space=sflag, size = 0x4, scoped, tag = 'scoped memory for tpu_custom_call.1']
    #allocation7 [shape = 'u8[16384]{0}', space=vmem, size = 0x4000, scoped, tag = 'output window, operand 0']
    %10 = vsyncpa [#allocation3], 0
    %s11 = scalar_lea.sflag [#allocation3], 1
    %12 = vsyncpa %s11, 0
    %13 = vsyncpa [#allocation6], 0
    %14 = vsyncpa [#allocation4], 0
    %s15 = scalar_lea.sflag [#allocation4], 1
    %16 = vsyncpa %s15, 0
    loop: start=0, step=1, limit=5
    $region2: #{tpu_custom_call.1} parent=1 // loop_pre_header
      _
    $region3: #{tpu_custom_call.1} parent=1 // loop_header
      %s18 = sphi 0, %s22
      %p19 = scmp.ge.s32.totalorder %s18, 5
      %s28 = sphi 0, %s30
      %s31 = sphi 0, %s28
      %s32 = sphi 0, %s31
      %s48 = sphi 0, %s32
      %s54 = sphi 0, %s56
      %s57 = sphi 0, %s54
      %s58 = sphi 0, %s57
      %s74 = sphi 0, %s58
      %s80 = sphi 0, %s82
      %s83 = sphi 0, %s80
      %s84 = sphi 0, %s83
      %s100 = sphi 0, %s84
      %s104 = sphi 0, %s104
      %s106 = sphi 0, %s104
      %s107 = sphi 0, %s106
      %s121 = sphi 0, %s107
      %s125 = sphi 0, %s125
      %s127 = sphi 0, %s125
      %s128 = sphi 0, %s127
      %s142 = sphi 0, %s128
      %s148 = sphi 0, %s150
      %s151 = sphi 0, %s148
      %s152 = sphi 0, %s151
      %s168 = sphi 0, %s152
    $region4: #{tpu_custom_call.1} parent=1 // loop_header_branch
      %21 = sbr.rel (%p19) target = $region8
    $region5: #{tpu_custom_call.1} parent=1 // loop_body
      %s23 = ssub.s32 %s18, 1
      %s24 = ssub.s32 %s18, 2
      %s25 = sadd.s32 %s18, 1
      %s26 = ssub.s32 %s18, %s25
      %p27 = scmp.eq.s32.totalorder %s26, 0
      %s29 = sadd.s32 %s28, 1
      %s30 = scalar_select %p27, %s28, %s29
      %p33 = pneg %p27
      %p34 = scmp.eq.s32.totalorder %s18, 2
      %p35 = por %p33, %p34
      %p36 = scmp.ne.s32.totalorder %s28, %s31
      %p37 = scmp.eq.s32.totalorder %s18, 0
      %p38 = por %p36, %p37
      %p39 = scmp.ne.s32.totalorder %s28, %s31
      %p40 = scmp.eq.s32.totalorder %s23, 2
      %p41 = por %p39, %p40
      %p42 = scmp.ne.s32.totalorder %s31, %s32
      %p43 = scmp.eq.s32.totalorder %s23, 0
      %p44 = por %p42, %p43
      %p45 = scmp.ne.s32.totalorder %s31, %s32
      %p46 = scmp.eq.s32.totalorder %s24, 2
      %p47 = por %p45, %p46
      %p49 = scmp.ne.s32.totalorder %s32, %s48
      %p50 = scmp.eq.s32.totalorder %s24, 0
      %p51 = por %p49, %p50
      %s52 = ssub.s32 %s18, %s25
      %p53 = scmp.eq.s32.totalorder %s52, 0
      %s55 = sadd.s32 %s54, 1
      %s56 = scalar_select %p53, %s54, %s55
      %p59 = pneg %p53
      %p60 = scmp.eq.s32.totalorder %s18, 2
      %p61 = por %p59, %p60
      %p62 = scmp.ne.s32.totalorder %s54, %s57
      %p63 = scmp.eq.s32.totalorder %s18, 0
      %p64 = por %p62, %p63
      %p65 = scmp.ne.s32.totalorder %s54, %s57
      %p66 = scmp.eq.s32.totalorder %s23, 2
      %p67 = por %p65, %p66
      %p68 = scmp.ne.s32.totalorder %s57, %s58
      %p69 = scmp.eq.s32.totalorder %s23, 0
      %p70 = por %p68, %p69
      %p71 = scmp.ne.s32.totalorder %s57, %s58
      %p72 = scmp.eq.s32.totalorder %s24, 2
      %p73 = por %p71, %p72
      %p75 = scmp.ne.s32.totalorder %s58, %s74
      %p76 = scmp.eq.s32.totalorder %s24, 0
      %p77 = por %p75, %p76
      %s78 = ssub.s32 %s18, %s25
      %p79 = scmp.eq.s32.totalorder %s78, 0
      %s81 = sadd.s32 %s80, 1
      %s82 = scalar_select %p79, %s80, %s81
      %p85 = pneg %p79
      %p86 = scmp.eq.s32.totalorder %s18, 2
      %p87 = por %p85, %p86
      %p88 = scmp.ne.s32.totalorder %s80, %s83
      %p89 = scmp.eq.s32.totalorder %s18, 0
      %p90 = por %p88, %p89
      %p91 = scmp.ne.s32.totalorder %s80, %s83
      %p92 = scmp.eq.s32.totalorder %s23, 2
      %p93 = por %p91, %p92
      %p94 = scmp.ne.s32.totalorder %s83, %s84
      %p95 = scmp.eq.s32.totalorder %s23, 0
      %p96 = por %p94, %p95
      %p97 = scmp.ne.s32.totalorder %s83, %s84
      %p98 = scmp.eq.s32.totalorder %s24, 2
      %p99 = por %p97, %p98
      %p101 = scmp.ne.s32.totalorder %s84, %s100
      %p102 = scmp.eq.s32.totalorder %s24, 0
      %p103 = por %p101, %p102
      %s105 = sadd.s32 %s104, 1
      %p108 = scmp.eq.s32.totalorder %s18, 2
      %p109 = scmp.ne.s32.totalorder %s104, %s106
      %p110 = scmp.eq.s32.totalorder %s18, 0
      %p111 = por %p109, %p110
      %p112 = scmp.ne.s32.totalorder %s104, %s106
      %p113 = scmp.eq.s32.totalorder %s23, 2
      %p114 = por %p112, %p113
      %p115 = scmp.ne.s32.totalorder %s106, %s107
      %p116 = scmp.eq.s32.totalorder %s23, 0
      %p117 = por %p115, %p116
      %p118 = scmp.ne.s32.totalorder %s106, %s107
      %p119 = scmp.eq.s32.totalorder %s24, 2
      %p120 = por %p118, %p119
      %p122 = scmp.ne.s32.totalorder %s107, %s121
      %p123 = scmp.eq.s32.totalorder %s24, 0
      %p124 = por %p122, %p123
      %s126 = sadd.s32 %s125, 1
      %p129 = scmp.eq.s32.totalorder %s18, 2
      %p130 = scmp.ne.s32.totalorder %s125, %s127
      %p131 = scmp.eq.s32.totalorder %s18, 0
      %p132 = por %p130, %p131
      %p133 = scmp.ne.s32.totalorder %s125, %s127
      %p134 = scmp.eq.s32.totalorder %s23, 2
      %p135 = por %p133, %p134
      %p136 = scmp.ne.s32.totalorder %s127, %s128
      %p137 = scmp.eq.s32.totalorder %s23, 0
      %p138 = por %p136, %p137
      %p139 = scmp.ne.s32.totalorder %s127, %s128
      %p140 = scmp.eq.s32.totalorder %s24, 2
      %p141 = por %p139, %p140
      %p143 = scmp.ne.s32.totalorder %s128, %s142
      %p144 = scmp.eq.s32.totalorder %s24, 0
      %p145 = por %p143, %p144
      %s146 = ssub.s32 %s18, %s25
      %p147 = scmp.eq.s32.totalorder %s146, 0
      %s149 = sadd.s32 %s148, 1
      %s150 = scalar_select %p147, %s148, %s149
      %p153 = pneg %p147
      %p154 = scmp.eq.s32.totalorder %s18, 2
      %p155 = por %p153, %p154
      %p156 = scmp.ne.s32.totalorder %s148, %s151
      %p157 = scmp.eq.s32.totalorder %s18, 0
      %p158 = por %p156, %p157
      %p159 = scmp.ne.s32.totalorder %s148, %s151
      %p160 = scmp.eq.s32.totalorder %s23, 2
      %p161 = por %p159, %p160
      %p162 = scmp.ne.s32.totalorder %s151, %s152
      %p163 = scmp.eq.s32.totalorder %s23, 0
      %p164 = por %p162, %p163
      %p165 = scmp.ne.s32.totalorder %s151, %s152
      %p166 = scmp.eq.s32.totalorder %s24, 2
      %p167 = por %p165, %p166
      %p169 = scmp.ne.s32.totalorder %s152, %s168
      %p170 = scmp.eq.s32.totalorder %s24, 0
      %p171 = por %p169, %p170
      %p172 = scmp.le.s32.totalorder 1, %s18
      %p173 = scmp.lt.s32.totalorder %s18, 4
      %p174 = pnand %p172, %p173
      %p175 = pneg %p174
      // Predicated region
      $region9: #{tpu_custom_call.1} parent=5 // pred_check
        _
      $region10: #{tpu_custom_call.1} parent=5 // pred_check_branch
        %177 = sbr.rel (%p174) target = $region12
      $region11: #{tpu_custom_call.1} parent=5 // pred_region
        %s178 = ssub.s32 %s18, 1
        // Predicated region
        $region13: #{tpu_custom_call.1} parent=11 // pred_check
          %p179 = pneg %p117
        $region14: #{tpu_custom_call.1} parent=11 // pred_check_branch
          %181 = sbr.rel (%p179) target = $region16
        $region15: #{tpu_custom_call.1} parent=11 // pred_region
          %s183 = ssub.s32 2048, 2048
          %184 = vsyncadd [#allocation6], %s183
          %s185 = sshll.u32 [#allocation5], 4
          %s186 = int_to_ptr.vmem [resolvable:$true] %s185
          %191 = dma.hbm_to_vmem [thread:$0]  %s3, 2048, %s186, [#allocation6], 128, 128, 8
        $region16: #{tpu_custom_call.1} parent=11 // pred_fallthru
          _
        // Predicated region
        $region17: #{tpu_custom_call.1} parent=11 // pred_check
          %p192 = pneg %p138
        $region18: #{tpu_custom_call.1} parent=11 // pred_check_branch
          %194 = sbr.rel (%p192) target = $region20
        $region19: #{tpu_custom_call.1} parent=11 // pred_region
          _
        $region20: #{tpu_custom_call.1} parent=11 // pred_fallthru
          _
      $region12: #{tpu_custom_call.1} parent=5 // pred_fallthru
        _
      %p195 = scmp.lt.s32.totalorder %s18, 3
      // Predicated region
      $region21: #{tpu_custom_call.1} parent=5 // pred_check
        %p196 = pneg %p195
      $region22: #{tpu_custom_call.1} parent=5 // pred_check_branch
        %198 = sbr.rel (%p196) target = $region24
      $region23: #{tpu_custom_call.1} parent=5 // pred_region
        // Predicated region
        $region25: #{tpu_custom_call.1} parent=23 // pred_check
          %p199 = pneg %p38
        $region26: #{tpu_custom_call.1} parent=23 // pred_check_branch
          %201 = sbr.rel (%p199) target = $region28
        $region27: #{tpu_custom_call.1} parent=23 // pred_region
          %s202 = smul.u32 2, %s18
          %p203 = scmp.lt.s32.totalorder %s202, 5
          %s204 = scalar_select %p203, %s202, 5
          %s205 = smul.addr %s204, 8
          %s206 = scalar_lea.vmem %s0, %s205
          %s207 = smul.u32 2, %s18
        $region28: #{tpu_custom_call.1} parent=23 // pred_fallthru
          _
        // Predicated region
        $region29: #{tpu_custom_call.1} parent=23 // pred_check
          %p208 = pneg %p64
        $region30: #{tpu_custom_call.1} parent=23 // pred_check_branch
          %210 = sbr.rel (%p208) target = $region32
        $region31: #{tpu_custom_call.1} parent=23 // pred_region
          %s211 = smul.u32 2, %s18
          %p212 = scmp.lt.s32.totalorder %s211, 5
          %s213 = scalar_select %p212, %s211, 5
          %s214 = smul.addr %s213, 8
          %s215 = scalar_lea.vmem %s1, %s214
          %s216 = smul.u32 2, %s18
        $region32: #{tpu_custom_call.1} parent=23 // pred_fallthru
          _
        // Predicated region
        $region33: #{tpu_custom_call.1} parent=23 // pred_check
          %p217 = pneg %p90
        $region34: #{tpu_custom_call.1} parent=23 // pred_check_branch
          %219 = sbr.rel (%p217) target = $region36
        $region35: #{tpu_custom_call.1} parent=23 // pred_region
          %s220 = sand.u32 %s80, 1
          %s221 = scalar_lea.sflag [#allocation3], %s220
          %s222 = sand.u32 %s80, 1
          %s223 = smul.addr %s222, 16
          %s224 = scalar_lea.vmem [#allocation2], %s223
          %s225 = smul.u32 2, %s18
          %s227 = ssub.s32 256, 256
          %228 = vsyncadd %s221, %s227
          %s229 = smul.addr %s225, 128
          %s230 = scalar_lea.hbm %s2, %s229
          %s231 = sshll.u32 %s224, 4
          %s232 = int_to_ptr.vmem [resolvable:$true] %s231
          %237 = dma.hbm_to_vmem [thread:$0]  %s230, 256, %s232, %s221, 128, 128, 8
        $region36: #{tpu_custom_call.1} parent=23 // pred_fallthru
          _
      $region24: #{tpu_custom_call.1} parent=5 // pred_fallthru
        _
      %p238 = scmp.le.s32.totalorder 1, %s18
      %p239 = scmp.lt.s32.totalorder %s18, 4
      %p240 = pnand %p238, %p239
      %p241 = pneg %p240
      // Predicated region
      $region37: #{tpu_custom_call.1} parent=5 // pred_check
        _
      $region38: #{tpu_custom_call.1} parent=5 // pred_check_branch
        %243 = sbr.rel (%p240) target = $region40
      $region39: #{tpu_custom_call.1} parent=5 // pred_region
        %s244 = ssub.s32 %s18, 1
        %s245 = sand.u32 %s83, 1
        %s246 = scalar_lea.sflag [#allocation3], %s245
        %s247 = sand.u32 %s83, 1
        %s248 = smul.addr %s247, 16
        %s249 = scalar_lea.vmem [#allocation2], %s248
        // Predicated region
        $region41: #{tpu_custom_call.1} parent=39 // pred_check
          %p250 = pneg %p96
        $region42: #{tpu_custom_call.1} parent=39 // pred_check_branch
          %252 = sbr.rel (%p250) target = $region44
        $region43: #{tpu_custom_call.1} parent=39 // pred_region
          %253 = dma.done %s246, 256
        $region44: #{tpu_custom_call.1} parent=39 // pred_fallthru
          _
        // Predicated region
        $region45: #{tpu_custom_call.1} parent=39 // pred_check
          %p254 = pneg %p117
        $region46: #{tpu_custom_call.1} parent=39 // pred_check_branch
          %256 = sbr.rel (%p254) target = $region48
        $region47: #{tpu_custom_call.1} parent=39 // pred_region
          %257 = dma.done [#allocation6], 2048
        $region48: #{tpu_custom_call.1} parent=39 // pred_fallthru
          _
        %s258 = smul.u32 2, %s23
        %p259 = scmp.lt.s32.totalorder %s258, 5
        %s260 = scalar_select %p259, %s258, 5
        %s261 = smul.addr %s260, 8
        %s262 = scalar_lea.vmem %s0, %s261
        %p263 = pneg %p44
        %p264 = pneg %p41
        %s265 = smul.u32 2, %s23
        %p266 = scmp.lt.s32.totalorder %s265, 5
        %s267 = scalar_select %p266, %s265, 5
        %s268 = smul.addr %s267, 8
        %s269 = scalar_lea.vmem %s1, %s268
        %p270 = pneg %p70
        %p271 = pneg %p67
        %s272 = sand.u32 %s83, 1
        %s273 = scalar_lea.sflag [#allocation3], %s272
        %s274 = sand.u32 %s83, 1
        %s275 = smul.addr %s274, 16
        %s276 = scalar_lea.vmem [#allocation2], %s275
        %p277 = pneg %p96
        %p278 = pneg %p93
        %p279 = pneg %p117
        %p280 = pneg %p114
        %p281 = pneg %p138
        %p282 = pneg %p135
        %p283 = pneg %p164
        %p284 = pneg %p161
        %s285 = sand.u32 %s151, 1
        %s286 = scalar_lea.sflag [#allocation4], %s285
        %s287 = sand.u32 %s151, 1
        %s288 = smul.addr %s287, 16
        %s289 = scalar_lea.vmem [#allocation7], %s288
        %s290 = smul.u32 2, %s23
        %p291 = scmp.lt.s32.totalorder %s290, 5
        %s292 = scalar_select %p291, %s290, 5
        %s293 = smul.addr %s292, 8
        %s294 = scalar_lea.vmem %s0, %s293
        %s295 = smul.u32 2, %s23
        %s296 = smul.u32 2, %s23
        %p297 = scmp.lt.s32.totalorder %s296, 5
        %s298 = scalar_select %p297, %s296, 5
        %s299 = smul.addr %s298, 8
        %s300 = scalar_lea.vmem %s1, %s299
        %s301 = smul.u32 2, %s23
        %s302 = smul.u32 2, %s23
        %s303 = smul.u32 2, %s23
        %v304 = vld [vmem:[%s294] sm:$0xff]
        %v305 = vld [vmem:[%s294 + $0x8] sm:$0xff]
        %v306 = vlaneseq
        %v307 = vand.u32 %v306, 127
        %308 = vset.pattern.permute.xlu0 0
        %309 = vperm.xlu0 %308, %v304
        %v310 = vpop.permute.xlu0 %309
        %311 = vset.pattern.permute.xlu0 0
        %312 = vperm.xlu0 %311, %v305
        %v313 = vpop.permute.xlu0 %312
        %vm314 = vcmp.eq.s32.totalorder %v310, %v307
        %vm315 = vcmp.eq.s32.totalorder %v313, %v307
        %v316 = vsel %vm314, 1, 0
        %v317 = vsel %vm315, 1, 0
        %v318 = vcvt.s32.f32 %v316
        %v319 = vcvt.s32.f32 %v317
        %v320 = vld [vmem:[%s300] sm:$0xff]
        %v321 = vld [vmem:[%s300 + $0x8] sm:$0xff]
        %vm322 = vcmask 130048
        %v324 = vsel %vm322, %v318, 0
        %v327 = vsel %vm322, %v319, 0
        %329 = vmatprep.subr.mxu0 0.0
        %330 = vmatpush1.msra.mxu0 %v320
        %331 = vmatprep.subr.mxu0 0.0
        %332 = vmatpush1.msra.mxu0 %v321
        %333 = vmatprep.subr.mxu0 0.0
        %334 = vmatpush1.msra.mxu0 0.0
        %335 = vmatprep.subr.mxu0 0.0
        %336 = vmatpush1.msra.mxu0 0.0
        %337 = vmatprep.subr.mxu0 0.0
        %338 = vmatpush1.msra.mxu0 0.0
        %339 = vmatprep.subr.mxu0 0.0
        %340 = vmatpush1.msra.mxu0 0.0
        %341 = vmatprep.subr.mxu0 0.0
        %342 = vmatpush1.msra.mxu0 0.0
        %343 = vmatprep.subr.mxu0 0.0
        %344 = vmatpush1.msra.mxu0 0.0
        %345 = vmatprep.subr.mxu0 0.0
        %346 = vmatpush1.msra.mxu0 0.0
        %347 = vmatprep.subr.mxu0 0.0
        %348 = vmatpush1.msra.mxu0 0.0
        %349 = vmatprep.subr.mxu0 0.0
        %350 = vmatpush1.msra.mxu0 0.0
        %351 = vmatprep.subr.mxu0 0.0
        %352 = vmatpush1.msra.mxu0 0.0
        %353 = vmatprep.subr.mxu0 0.0
        %354 = vmatpush1.msra.mxu0 0.0
        %355 = vmatprep.subr.mxu0 0.0
        %356 = vmatpush1.msra.mxu0 0.0
        %357 = vmatprep.subr.mxu0 0.0
        %358 = vmatpush1.msra.mxu0 0.0
        %359 = vmatprep.subr.mxu0 0.0
        %360 = vmatpush1.msra.mxu0 0.0
        %361 = vmatprep.subr.mxu0 0.0
        %362 = vmatpush1.msra.mxu0 0.0
        %363 = vmatprep.subr.mxu0 0.0
        %364 = vmatpush1.msra.mxu0 0.0
        %365 = vmatprep.subr.mxu0 0.0
        %366 = vmatpush1.msra.mxu0 0.0
        %367 = vmatprep.subr.mxu0 0.0
        %368 = vmatpush1.msra.mxu0 0.0
        %369 = vmatprep.subr.mxu0 0.0
        %370 = vmatpush1.msra.mxu0 0.0
        %371 = vmatprep.subr.mxu0 0.0
        %372 = vmatpush1.msra.mxu0 0.0
        %373 = vmatprep.subr.mxu0 0.0
        %374 = vmatpush1.msra.mxu0 0.0
        %375 = vmatprep.subr.mxu0 0.0
        %376 = vmatpush1.msra.mxu0 0.0
        %377 = vmatprep.subr.mxu0 0.0
        %378 = vmatpush1.msra.mxu0 0.0
        %379 = vmatprep.subr.mxu0 0.0
        %380 = vmatpush1.msra.mxu0 0.0
        %381 = vmatprep.subr.mxu0 0.0
        %382 = vmatpush1.msra.mxu0 0.0
        %383 = vmatprep.subr.mxu0 0.0
        %384 = vmatpush1.msra.mxu0 0.0
        %385 = vmatprep.subr.mxu0 0.0
        %386 = vmatpush1.msra.mxu0 0.0
        %387 = vmatprep.subr.mxu0 0.0
        %388 = vmatpush1.msra.mxu0 0.0
        %389 = vmatprep.subr.mxu0 0.0
        %390 = vmatpush1.msra.mxu0 0.0
        %391 = vmatprep.subr.mxu0 0.0
        %392 = vmatpush1.msra.mxu0 0.0
        %393 = vmatprep.mubr.f32.mxu0 0.0
        %394 = vmatmul.mubr.f32.gmra.mrb[0].mxu0 %v324
        %v395 = vpop.f32.mrb[0].mxu0
        %v396 = vadd.f32 0.0, %v395
        %v397 = vpop.f32.mrb[0].mxu0
        %398 = vmatprep.mubr.f32.mxu0 0.0
        %399 = vmatmul.mubr.f32.gmra.mrb[0].mxu0 %v327
        %v400 = vpop.f32.mrb[0].mxu0
        %v401 = vadd.f32 0.0, %v400
        %v402 = vpop.f32.mrb[0].mxu0
        %403 = vdwg.mxu0
        %v404 = vld [vmem:[#allocation5] sm:$0xff]
        %v405 = vld [vmem:[#allocation5 + $0x8] sm:$0xff]
        %v406 = vld [vmem:[#allocation5 + $0x10] sm:$0xff]
        %v407 = vld [vmem:[#allocation5 + $0x18] sm:$0xff]
        %v408 = vld [vmem:[#allocation5 + $0x20] sm:$0xff]
        %v409 = vld [vmem:[#allocation5 + $0x28] sm:$0xff]
        %v410 = vld [vmem:[#allocation5 + $0x30] sm:$0xff]
        %v411 = vld [vmem:[#allocation5 + $0x38] sm:$0xff]
        %v412 = vld [vmem:[#allocation5 + $0x40] sm:$0xff]
        %v413 = vld [vmem:[#allocation5 + $0x48] sm:$0xff]
        %v414 = vld [vmem:[#allocation5 + $0x50] sm:$0xff]
        %v415 = vld [vmem:[#allocation5 + $0x58] sm:$0xff]
        %v416 = vld [vmem:[#allocation5 + $0x60] sm:$0xff]
        %v417 = vld [vmem:[#allocation5 + $0x68] sm:$0xff]
        %v418 = vld [vmem:[#allocation5 + $0x70] sm:$0xff]
        %v419 = vld [vmem:[#allocation5 + $0x78] sm:$0xff]
        %v420 = vld [vmem:[%s4] sm:$0x1]
        %v422 = vlaneseq
        %v423 = vshrl.u32 %v422, 7
        %v424 = vsub.s32 0, %v423
        %v425 = vrot.slane %v420, %v424
        %427 = vmatprep.subr.mxu0 0.0
        %428 = vmatpush1.msra.mxu0 %v404
        %429 = vmatprep.subr.mxu0 0.0
        %430 = vmatpush1.msra.mxu0 %v405
        %431 = vmatprep.subr.mxu0 0.0
        %432 = vmatpush1.msra.mxu0 %v406
        %433 = vmatprep.subr.mxu0 0.0
        %434 = vmatpush1.msra.mxu0 %v407
        %435 = vmatprep.subr.mxu0 0.0
        %436 = vmatpush1.msra.mxu0 %v408
        %437 = vmatprep.subr.mxu0 0.0
        %438 = vmatpush1.msra.mxu0 %v409
        %439 = vmatprep.subr.mxu0 0.0
        %440 = vmatpush1.msra.mxu0 %v410
        %441 = vmatprep.subr.mxu0 0.0
        %442 = vmatpush1.msra.mxu0 %v411
        %443 = vmatprep.subr.mxu0 0.0
        %444 = vmatpush1.msra.mxu0 %v412
        %445 = vmatprep.subr.mxu0 0.0
        %446 = vmatpush1.msra.mxu0 %v413
        %447 = vmatprep.subr.mxu0 0.0
        %448 = vmatpush1.msra.mxu0 %v414
        %449 = vmatprep.subr.mxu0 0.0
        %450 = vmatpush1.msra.mxu0 %v415
        %451 = vmatprep.subr.mxu0 0.0
        %452 = vmatpush1.msra.mxu0 %v416
        %453 = vmatprep.subr.mxu0 0.0
        %454 = vmatpush1.msra.mxu0 %v417
        %455 = vmatprep.subr.mxu0 0.0
        %456 = vmatpush1.msra.mxu0 %v418
        %457 = vmatprep.subr.mxu0 0.0
        %458 = vmatpush1.msra.mxu0 %v419
        %459 = vmatprep.subr.mxu0 0.0
        %460 = vmatpush1.msra.mxu0 0.0
        %461 = vmatprep.subr.mxu0 0.0
        %462 = vmatpush1.msra.mxu0 0.0
        %463 = vmatprep.subr.mxu0 0.0
        %464 = vmatpush1.msra.mxu0 0.0
        %465 = vmatprep.subr.mxu0 0.0
        %466 = vmatpush1.msra.mxu0 0.0
        %467 = vmatprep.subr.mxu0 0.0
        %468 = vmatpush1.msra.mxu0 0.0
        %469 = vmatprep.subr.mxu0 0.0
        %470 = vmatpush1.msra.mxu0 0.0
        %471 = vmatprep.subr.mxu0 0.0
        %472 = vmatpush1.msra.mxu0 0.0
        %473 = vmatprep.subr.mxu0 0.0
        %474 = vmatpush1.msra.mxu0 0.0
        %475 = vmatprep.subr.mxu0 0.0
        %476 = vmatpush1.msra.mxu0 0.0
        %477 = vmatprep.subr.mxu0 0.0
        %478 = vmatpush1.msra.mxu0 0.0
        %479 = vmatprep.subr.mxu0 0.0
        %480 = vmatpush1.msra.mxu0 0.0
        %481 = vmatprep.subr.mxu0 0.0
        %482 = vmatpush1.msra.mxu0 0.0
        %483 = vmatprep.subr.mxu0 0.0
        %484 = vmatpush1.msra.mxu0 0.0
        %485 = vmatprep.subr.mxu0 0.0
        %486 = vmatpush1.msra.mxu0 0.0
        %487 = vmatprep.subr.mxu0 0.0
        %488 = vmatpush1.msra.mxu0 0.0
        %489 = vmatprep.subr.mxu0 0.0
        %490 = vmatpush1.msra.mxu0 0.0
        %491 = vmatprep.mubr.f32.mxu0 0.0
        %492 = vmatmul.mubr.f32.gmra.mrb[0].mxu0 %v396
        %v493 = vpop.f32.mrb[0].mxu0
        %v494 = vadd.f32 %v425, %v493
        %v495 = vpop.f32.mrb[0].mxu0
        %496 = vmatprep.mubr.f32.mxu0 0.0
        %497 = vmatmul.mubr.f32.gmra.mrb[0].mxu0 %v401
        %v498 = vpop.f32.mrb[0].mxu0
        %v499 = vadd.f32 %v425, %v498
        %v500 = vpop.f32.mrb[0].mxu0
        %501 = vdwg.mxu0
        %v502 = vld [vmem:[%s249] sm:$0xff]
        %v503 = vld [vmem:[%s249 + $0x8] sm:$0xff]
        %v504 = vadd.f32 %v502, %v494
        %v505 = vadd.f32 %v503, %v499
        %506 = vst [vmem:[%s289] sm:$0xff] %v504
        %507 = vst [vmem:[%s289 + $0x8] sm:$0xff] %v505
        %s508 = sand.u32 %s151, 1
        %s509 = scalar_lea.sflag [#allocation4], %s508
        %s510 = sand.u32 %s151, 1
        %s511 = smul.addr %s510, 16
        %s512 = scalar_lea.vmem [#allocation7], %s511
        // Predicated region
        $region49: #{tpu_custom_call.1} parent=39 // pred_check
          %p513 = pneg %p161
        $region50: #{tpu_custom_call.1} parent=39 // pred_check_branch
          %515 = sbr.rel (%p513) target = $region52
        $region51: #{tpu_custom_call.1} parent=39 // pred_region
          %s516 = smul.u32 2, %s23
          %s518 = ssub.s32 256, 256
          %519 = vsyncadd %s509, %s518
          %s520 = smul.addr %s516, 128
          %s521 = scalar_lea.hbm %s5, %s520
          %s522 = sshll.u32 %s512, 4
          %s523 = int_to_ptr.vmem [resolvable:$true] %s522
          %528 = dma.vmem_to_hbm [thread:$0]  %s523, 256, %s521, %s509, 128, 128, 8
        $region52: #{tpu_custom_call.1} parent=39 // pred_fallthru
          _
      $region40: #{tpu_custom_call.1} parent=5 // pred_fallthru
        _
      %p529 = scmp.le.s32.totalorder 2, %s18
      // Predicated region
      $region53: #{tpu_custom_call.1} parent=5 // pred_check
        %p530 = pneg %p529
      $region54: #{tpu_custom_call.1} parent=5 // pred_check_branch
        %532 = sbr.rel (%p530) target = $region56
      $region55: #{tpu_custom_call.1} parent=5 // pred_region
        %s533 = ssub.s32 %s18, 2
        // Predicated region
        $region57: #{tpu_custom_call.1} parent=55 // pred_check
          %p534 = pneg %p167
        $region58: #{tpu_custom_call.1} parent=55 // pred_check_branch
          %536 = sbr.rel (%p534) target = $region60
        $region59: #{tpu_custom_call.1} parent=55 // pred_region
          %s537 = sand.u32 %s152, 1
          %s538 = scalar_lea.sflag [#allocation4], %s537
          %s539 = sand.u32 %s152, 1
          %s540 = smul.addr %s539, 16
          %s541 = scalar_lea.vmem [#allocation7], %s540
          %542 = dma.done %s538, 256
        $region60: #{tpu_custom_call.1} parent=55 // pred_fallthru
          _
      $region56: #{tpu_custom_call.1} parent=5 // pred_fallthru
        _
    $region6: #{tpu_custom_call.1} parent=1 // loop_footer
      %s22 = sadd.s32 1, %s18
    $region7: #{tpu_custom_call.1} parent=1 // loop_footer_branch
      %17 = sbr.rel target = $region3
    $region8: #{tpu_custom_call.1} parent=1 // loop_exit
      _
    %543 = vsyncpa [#allocation3], 1
    %s544 = scalar_lea.sflag [#allocation3], 1
    %545 = vsyncpa %s544, 1
    %546 = vsyncpa [#allocation6], 1
    %547 = vsyncpa [#allocation4], 1
    %s548 = scalar_lea.sflag [#allocation4], 1
    %549 = vsyncpa %s548, 1

</llo_original>
